<compile_context>
chip_gen: v5e
topology: v5e:2x2
jax: 0.10.0
libtpu: 0.0.40
codegen_flags: <defaults>
</compile_context>

<pallas_src>
import math

import jax
import jax.numpy as jnp
from jax import lax
from jax.experimental import pallas as pl
from jax.experimental.pallas import tpu as pltpu

# ---- model hyperparameters (match the PyTorch module defaults) ----
JOINTS = 6
IN_FEAT = JOINTS * 2          # 12
HIDDEN = 32
NHEAD = 4
HEAD_DIM = HIDDEN // NHEAD    # 8
HALF_HIDDEN = HIDDEN // 2     # 16

BATCH = 2
SEQ = 8
TOKENS = BATCH * SEQ          # 16
HT = NHEAD * TOKENS           # 64 head-stacked token rows

# ---- bf16 weight slab layout (rows 16-aligned for bf16 sublane packing) ----
R_W1 = 0        # fused [wq|wk|wv]            (12, 96)
R_W2 = 16       # block-diag MHA in-proj      (96, 96)  (q block pre-scaled)
R_WO = 112      # attention out-projection    (32, 32)
R_W5 = 144      # linear5                     (32, 16)
R_W4T = 176     # linear4 weight, transposed  (1, 16)
SLAB_ROWS, SLAB_COLS = 192, 96

# ---- f32 aux slab (biases + precomputed masks), rows 8-aligned ----
R_B1 = 0        # [bq|bk|bv]                  (1, 96)
R_B2 = 8        # [bqi*scale|bki|bvi]         (1, 96)
R_BO = 16       # out-proj bias               (1, 32)
R_B5 = 24       # linear5 bias                (1, 16)
R_B4 = 32       # linear4 bias                (1, 1)
R_ABIAS = 40    # batch block-attn bias, head-tiled (64, 16): 0 / -1e30
R_HMASK = 104   # head-block selector               (64, 32): 1 / 0
AUX_ROWS, AUX_COLS = 168, 96


def torque_kernel(x_ref, w_ref, aux_ref, o_ref):
    f32, bf16 = jnp.float32, jnp.bfloat16
    x = x_ref[...].astype(bf16)                                    # (16, 12)

    # fused first layer: relu(x @ [wq|wk|wv] + [bq|bk|bv]) -> (16, 96)
    w1 = w_ref[R_W1:R_W1 + IN_FEAT, :]
    b1 = aux_ref[R_B1:R_B1 + 1, :]
    h1 = jnp.maximum(jnp.dot(x, w1, preferred_element_type=f32) + b1, 0.0)

    # fused block-diagonal MHA in-projection (q block pre-scaled by 1/sqrt(dh))
    w2 = w_ref[R_W2:R_W2 + 3 * HIDDEN, :]
    b2 = aux_ref[R_B2:R_B2 + 1, :]
    qkv = jnp.dot(h1.astype(bf16), w2, preferred_element_type=f32) + b2  # (16, 96)

    qp = qkv[:, 0:HIDDEN]                                          # (16, 32) scaled q
    kp = qkv[:, HIDDEN:2 * HIDDEN]                                 # (16, 32)
    vp = qkv[:, 2 * HIDDEN:3 * HIDDEN]                             # (16, 32)

    head_mask = aux_ref[R_HMASK:R_HMASK + HT, 0:HIDDEN]            # (64, 32) 1/0
    attn_bias = aux_ref[R_ABIAS:R_ABIAS + HT, 0:TOKENS]            # (64, 16) 0/-1e30

    # ONE score matmul for all heads: block-masked, sublane-replicated q vs. k.
    # row h*16+i of q_bd holds q_head_h[i] in its own 8 lanes, zeros elsewhere,
    # so q_bd @ kp^T gives the head-stacked (64, 16) score blocks exactly.
    q_rep = jnp.concatenate([qp, qp, qp, qp], axis=0)              # (64, 32)
    q_bd = q_rep * head_mask
    s = lax.dot_general(q_bd.astype(bf16), kp.astype(bf16),
                        (((1,), (1,)), ((), ())),
                        preferred_element_type=f32) + attn_bias    # (64, 16)

    # one softmax over the stacked tile (single max / exp / sum / reciprocal)
    s = s - jnp.max(s, axis=-1, keepdims=True)
    p = jnp.exp(s)
    p = p * pl.reciprocal(jnp.sum(p, axis=-1, keepdims=True), approx=True)

    # ONE P@V for all heads; head_mask kills the cross-head columns.
    o_full = jnp.dot(p.astype(bf16), vp.astype(bf16),
                     preferred_element_type=f32)                   # (64, 32)
    o_bd = o_full * head_mask

    # ONE out-projection over the head-stacked rows, then reduce over heads.
    wo = w_ref[R_WO:R_WO + HIDDEN, 0:HIDDEN]
    z = jnp.dot(o_bd.astype(bf16), wo, preferred_element_type=f32)  # (64, 32)
    bo = aux_ref[R_BO:R_BO + 1, 0:HIDDEN]
    attn = (z[0:TOKENS] + z[TOKENS:2 * TOKENS]
            + z[2 * TOKENS:3 * TOKENS] + z[3 * TOKENS:4 * TOKENS] + bo)  # (16, 32)

    # linear5 + ReLU
    w5 = w_ref[R_W5:R_W5 + HIDDEN, 0:HALF_HIDDEN]
    b5 = aux_ref[R_B5:R_B5 + 1, 0:HALF_HIDDEN]
    h5 = jnp.maximum(
        jnp.dot(attn.astype(bf16), w5, preferred_element_type=f32) + b5, 0.0)

    # linear4 + tanh, as a lane-dense (1, T) row store
    w4t = w_ref[R_W4T:R_W4T + 1, 0:HALF_HIDDEN]                    # (1, 16)
    b4 = aux_ref[R_B4:R_B4 + 1, 0:1]                               # (1, 1)
    out_row = lax.dot_general(w4t, h5.astype(bf16),
                              (((1,), (1,)), ((), ())),
                              preferred_element_type=f32)          # (1, 16)
    o_ref[...] = jnp.tanh(out_row + b4)


def torque_trans_forward(x, slab, aux):
    """x: (B, S, IN_FEAT) f32. slab: bf16 weights. aux: f32 biases + masks."""
    B, S, F = x.shape
    T = B * S
    xf = x.reshape(T, F)                 # token-major flatten, outside the kernel

    out = pl.pallas_call(
        torque_kernel,
        out_shape=jax.ShapeDtypeStruct((1, T), jnp.float32),
        in_specs=[
            pl.BlockSpec(memory_space=pltpu.MemorySpace.VMEM),
            pl.BlockSpec(memory_space=pltpu.MemorySpace.VMEM),
            pl.BlockSpec(memory_space=pltpu.MemorySpace.VMEM),
        ],
        out_specs=pl.BlockSpec(memory_space=pltpu.MemorySpace.VMEM),
    )(xf, slab, aux)
    return out.reshape(B, S, 1)


def init_params(key):
    """Deterministic init mimicking PyTorch Linear default (uniform +-1/sqrt(fan_in)).
    Weights stored pre-transposed so math is x @ W + b."""
    def linear(key, fan_in, fan_out):
        k1, k2 = jax.random.split(key)
        bound = 1.0 / (fan_in ** 0.5)
        w = jax.random.uniform(k1, (fan_in, fan_out), jnp.float32, -bound, bound)
        b = jax.random.uniform(k2, (1, fan_out), jnp.float32, -bound, bound)
        return w, b

    keys = jax.random.split(key, 9)
    wk, bk = linear(keys[0], IN_FEAT, HIDDEN)
    wq, bq = linear(keys[1], IN_FEAT, HIDDEN)
    wv, bv = linear(keys[2], IN_FEAT, HIDDEN)
    wqi, bqi = linear(keys[3], HIDDEN, HIDDEN)
    wki, bki = linear(keys[4], HIDDEN, HIDDEN)
    wvi, bvi = linear(keys[5], HIDDEN, HIDDEN)
    wo, bo = linear(keys[6], HIDDEN, HIDDEN)
    w5, b5 = linear(keys[7], HIDDEN, HALF_HIDDEN)
    w4, b4 = linear(keys[8], HALF_HIDDEN, 1)
    return dict(
        wk=wk, bk=bk, wq=wq, bq=bq, wv=wv, bv=bv,
        wqi=wqi, bqi=bqi, wki=wki, bki=bki, wvi=wvi, bvi=bvi,
        wo=wo, bo=bo, w5=w5, b5=b5, w4=w4, b4=b4,
    )


def pack_params(p):
    """Pack weights into one bf16 slab and biases + precomputed masks into a
    small f32 aux slab.  The 1/sqrt(HEAD_DIM) attention scale is folded into
    the q in-projection weight and bias; linear4's weight is stored transposed."""
    scale = 1.0 / math.sqrt(HEAD_DIM)

    slab = jnp.zeros((SLAB_ROWS, SLAB_COLS), jnp.float32)
    w1 = jnp.concatenate([p["wq"], p["wk"], p["wv"]], axis=1)       # (12, 96)
    w2 = jnp.zeros((3 * HIDDEN, 3 * HIDDEN), jnp.float32)
    w2 = w2.at[0:HIDDEN, 0:HIDDEN].set(p["wqi"] * scale)
    w2 = w2.at[HIDDEN:2 * HIDDEN, HIDDEN:2 * HIDDEN].set(p["wki"])
    w2 = w2.at[2 * HIDDEN:3 * HIDDEN, 2 * HIDDEN:3 * HIDDEN].set(p["wvi"])
    slab = slab.at[R_W1:R_W1 + IN_FEAT, 0:3 * HIDDEN].set(w1)
    slab = slab.at[R_W2:R_W2 + 3 * HIDDEN, 0:3 * HIDDEN].set(w2)
    slab = slab.at[R_WO:R_WO + HIDDEN, 0:HIDDEN].set(p["wo"])
    slab = slab.at[R_W5:R_W5 + HIDDEN, 0:HALF_HIDDEN].set(p["w5"])
    slab = slab.at[R_W4T:R_W4T + 1, 0:HALF_HIDDEN].set(p["w4"].T)
    slab = slab.astype(jnp.bfloat16)

    aux = jnp.zeros((AUX_ROWS, AUX_COLS), jnp.float32)
    b1 = jnp.concatenate([p["bq"], p["bk"], p["bv"]], axis=1)       # (1, 96)
    b2 = jnp.concatenate([p["bqi"] * scale, p["bki"], p["bvi"]], axis=1)
    aux = aux.at[R_B1:R_B1 + 1, 0:3 * HIDDEN].set(b1)
    aux = aux.at[R_B2:R_B2 + 1, 0:3 * HIDDEN].set(b2)
    aux = aux.at[R_BO:R_BO + 1, 0:HIDDEN].set(p["bo"])
    aux = aux.at[R_B5:R_B5 + 1, 0:HALF_HIDDEN].set(p["b5"])
    aux = aux.at[R_B4:R_B4 + 1, 0:1].set(p["b4"])

    # batch block-attention bias (tokens attend only within their own batch
    # element), tiled once per head into a (64, 16) block.
    tok = jnp.arange(TOKENS)
    same_batch = (tok[:, None] // SEQ) == (tok[None, :] // SEQ)
    bias16 = jnp.where(same_batch, 0.0, -1e30).astype(jnp.float32)  # (16, 16)
    attn_bias = jnp.concatenate([bias16] * NHEAD, axis=0)           # (64, 16)
    aux = aux.at[R_ABIAS:R_ABIAS + HT, 0:TOKENS].set(attn_bias)

    # head-block selector: row block h keeps only head h's 8 hidden lanes.
    rows = jnp.arange(HT)
    cols = jnp.arange(HIDDEN)
    head_mask = ((rows[:, None] // TOKENS)
                 == (cols[None, :] // HEAD_DIM)).astype(jnp.float32)  # (64, 32)
    aux = aux.at[R_HMASK:R_HMASK + HT, 0:HIDDEN].set(head_mask)
    return slab, aux


def reference_forward(x, p):
    """Pure-JAX f32 reference (unfused, exact division) for sanity checking."""
    k = jax.nn.relu(x @ p["wk"] + p["bk"])
    q = jax.nn.relu(x @ p["wq"] + p["bq"])
    v = jax.nn.relu(x @ p["wv"] + p["bv"])
    qp = q @ p["wqi"] + p["bqi"]
    kp = k @ p["wki"] + p["bki"]
    vp = v @ p["wvi"] + p["bvi"]
    B, S, _ = x.shape
    qh = qp.reshape(B, S, NHEAD, HEAD_DIM).transpose(0, 2, 1, 3)
    kh = kp.reshape(B, S, NHEAD, HEAD_DIM).transpose(0, 2, 1, 3)
    vh = vp.reshape(B, S, NHEAD, HEAD_DIM).transpose(0, 2, 1, 3)
    s = jnp.einsum("bhqd,bhkd->bhqk", qh, kh) / (HEAD_DIM ** 0.5)
    pattn = jax.nn.softmax(s, axis=-1)
    o = jnp.einsum("bhqk,bhkd->bhqd", pattn, vh).transpose(0, 2, 1, 3).reshape(B, S, HIDDEN)
    o = o @ p["wo"] + p["bo"]
    h5 = jax.nn.relu(o @ p["w5"] + p["b5"])
    return jnp.tanh(h5 @ p["w4"] + p["b4"])


if __name__ == "__main__":
    key = jax.random.PRNGKey(0)
    pkey, xkey = jax.random.split(key)
    params = init_params(pkey)
    slab, aux = pack_params(params)
    x = jax.random.normal(xkey, (BATCH, SEQ, IN_FEAT), jnp.float32)

    out = torque_trans_forward(x, slab, aux)
    out = jax.block_until_ready(out)

    ref = reference_forward(x, params)
    assert out.shape == (BATCH, SEQ, 1), out.shape
    # Tolerance covers bf16 weight/operand rounding and the EUP approximate
    # softmax reciprocal vs. the full-f32 reference.
    err = float(jnp.max(jnp.abs(out - ref)))
    assert err < 3e-2, err

    print("KERNEL_OK")
</pallas_src>

<mosaic_0001>
module attributes {stable_mosaic.version = 11 : i64} {
  func.func @torque_kernel(%arg0: memref<16x12xf32, #tpu.memory_space<vmem>>, %arg1: memref<192x96xbf16, #tpu.memory_space<vmem>>, %arg2: memref<168x96xf32, #tpu.memory_space<vmem>>, %arg3: memref<1x16xf32, #tpu.memory_space<vmem>>) attributes {dimension_semantics = [], scalar_prefetch = 0 : i64, scratch_operands = 0 : i64, tpu.core_type = #tpu.core_type<tc>} {
    %c0 = arith.constant 0 : index
    %c0_0 = arith.constant 0 : index
    %0 = vector.load %arg0[%c0, %c0_0] : memref<16x12xf32, #tpu.memory_space<vmem>>, vector<16x12xf32>
    %1 = arith.truncf %0 : vector<16x12xf32> to vector<16x12xbf16>
    %c0_1 = arith.constant 0 : index
    %c0_2 = arith.constant 0 : index
    %2 = vector.load %arg1[%c0_1, %c0_2] : memref<192x96xbf16, #tpu.memory_space<vmem>>, vector<12x96xbf16>
    %c0_3 = arith.constant 0 : index
    %c0_4 = arith.constant 0 : index
    %3 = vector.load %arg2[%c0_3, %c0_4] : memref<168x96xf32, #tpu.memory_space<vmem>>, vector<1x96xf32>
    %cst = arith.constant dense<0.000000e+00> : vector<16x96xf32>
    %4 = tpu.matmul %1, %2, %cst {dimension_numbers = #tpu.dot_dimension_numbers<[1], [0], [0], [1], [0, 0, 1, 1], [], []>} : vector<16x12xbf16>, vector<12x96xbf16>, vector<16x96xf32> -> vector<16x96xf32>
    %5 = vector.broadcast %3 : vector<1x96xf32> to vector<16x96xf32>
    %6 = arith.addf %4, %5 : vector<16x96xf32>
    %cst_5 = arith.constant 0.000000e+00 : f32
    %7 = vector.broadcast %cst_5 : f32 to vector<16x96xf32>
    %8 = arith.maximumf %6, %7 : vector<16x96xf32>
    %c16 = arith.constant 16 : index
    %c0_6 = arith.constant 0 : index
    %9 = vector.load %arg1[%c16, %c0_6] : memref<192x96xbf16, #tpu.memory_space<vmem>>, vector<96x96xbf16>
    %c8 = arith.constant 8 : index
    %c0_7 = arith.constant 0 : index
    %10 = vector.load %arg2[%c8, %c0_7] : memref<168x96xf32, #tpu.memory_space<vmem>>, vector<1x96xf32>
    %11 = arith.truncf %8 : vector<16x96xf32> to vector<16x96xbf16>
    %cst_8 = arith.constant dense<0.000000e+00> : vector<16x96xf32>
    %12 = tpu.matmul %11, %9, %cst_8 {dimension_numbers = #tpu.dot_dimension_numbers<[1], [0], [0], [1], [0, 0, 1, 1], [], []>} : vector<16x96xbf16>, vector<96x96xbf16>, vector<16x96xf32> -> vector<16x96xf32>
    %13 = vector.broadcast %10 : vector<1x96xf32> to vector<16x96xf32>
    %14 = arith.addf %12, %13 : vector<16x96xf32>
    %15 = vector.extract_strided_slice %14 {offsets = [0, 0], sizes = [16, 32], strides = [1, 1]} : vector<16x96xf32> to vector<16x32xf32>
    %16 = vector.extract_strided_slice %14 {offsets = [0, 32], sizes = [16, 32], strides = [1, 1]} : vector<16x96xf32> to vector<16x32xf32>
    %17 = vector.extract_strided_slice %14 {offsets = [0, 64], sizes = [16, 32], strides = [1, 1]} : vector<16x96xf32> to vector<16x32xf32>
    %c104 = arith.constant 104 : index
    %c0_9 = arith.constant 0 : index
    %18 = vector.load %arg2[%c104, %c0_9] : memref<168x96xf32, #tpu.memory_space<vmem>>, vector<64x32xf32>
    %c40 = arith.constant 40 : index
    %c0_10 = arith.constant 0 : index
    %19 = vector.load %arg2[%c40, %c0_10] : memref<168x96xf32, #tpu.memory_space<vmem>>, vector<64x16xf32>
    %20 = tpu.concatenate %15, %15, %15, %15 in 0 : vector<16x32xf32>, vector<16x32xf32>, vector<16x32xf32>, vector<16x32xf32> -> vector<64x32xf32>
    %21 = arith.mulf %20, %18 : vector<64x32xf32>
    %22 = arith.truncf %21 : vector<64x32xf32> to vector<64x32xbf16>
    %23 = arith.truncf %16 : vector<16x32xf32> to vector<16x32xbf16>
    %cst_11 = arith.constant dense<0.000000e+00> : vector<64x16xf32>
    %24 = tpu.matmul %22, %23, %cst_11 {dimension_numbers = #tpu.dot_dimension_numbers<[1], [1], [0], [0], [0, 0, 1, 0], [], []>} : vector<64x32xbf16>, vector<16x32xbf16>, vector<64x16xf32> -> vector<64x16xf32>
    %25 = arith.addf %24, %19 : vector<64x16xf32>
    %cst_12 = arith.constant dense<0xFF800000> : vector<64xf32>
    %26 = vector.multi_reduction <maximumf>, %25, %cst_12 [1] : vector<64x16xf32> to vector<64xf32>
    %27 = vector.shape_cast %26 : vector<64xf32> to vector<64x1xf32>
    %28 = vector.broadcast %27 : vector<64x1xf32> to vector<64x16xf32>
    %29 = arith.subf %25, %28 : vector<64x16xf32>
    %30 = math.exp %29 : vector<64x16xf32>
    %cst_13 = arith.constant dense<0.000000e+00> : vector<64xf32>
    %31 = vector.multi_reduction <add>, %30, %cst_13 [1] : vector<64x16xf32> to vector<64xf32>
    %32 = vector.shape_cast %31 : vector<64xf32> to vector<64x1xf32>
    %33 = tpu.reciprocal %32 {approx = true} : vector<64x1xf32> -> vector<64x1xf32>
    %34 = vector.broadcast %33 : vector<64x1xf32> to vector<64x16xf32>
    %35 = arith.mulf %30, %34 : vector<64x16xf32>
    %36 = arith.truncf %35 : vector<64x16xf32> to vector<64x16xbf16>
    %37 = arith.truncf %17 : vector<16x32xf32> to vector<16x32xbf16>
    %cst_14 = arith.constant dense<0.000000e+00> : vector<64x32xf32>
    %38 = tpu.matmul %36, %37, %cst_14 {dimension_numbers = #tpu.dot_dimension_numbers<[1], [0], [0], [1], [0, 0, 1, 1], [], []>} : vector<64x16xbf16>, vector<16x32xbf16>, vector<64x32xf32> -> vector<64x32xf32>
    %39 = arith.mulf %38, %18 : vector<64x32xf32>
    %c112 = arith.constant 112 : index
    %c0_15 = arith.constant 0 : index
    %40 = vector.load %arg1[%c112, %c0_15] : memref<192x96xbf16, #tpu.memory_space<vmem>>, vector<32x32xbf16>
    %41 = arith.truncf %39 : vector<64x32xf32> to vector<64x32xbf16>
    %cst_16 = arith.constant dense<0.000000e+00> : vector<64x32xf32>
    %42 = tpu.matmul %41, %40, %cst_16 {dimension_numbers = #tpu.dot_dimension_numbers<[1], [0], [0], [1], [0, 0, 1, 1], [], []>} : vector<64x32xbf16>, vector<32x32xbf16>, vector<64x32xf32> -> vector<64x32xf32>
    %c16_17 = arith.constant 16 : index
    %c0_18 = arith.constant 0 : index
    %43 = vector.load %arg2[%c16_17, %c0_18] : memref<168x96xf32, #tpu.memory_space<vmem>>, vector<1x32xf32>
    %44 = vector.extract_strided_slice %42 {offsets = [0, 0], sizes = [16, 32], strides = [1, 1]} : vector<64x32xf32> to vector<16x32xf32>
    %45 = vector.extract_strided_slice %42 {offsets = [16, 0], sizes = [16, 32], strides = [1, 1]} : vector<64x32xf32> to vector<16x32xf32>
    %46 = arith.addf %44, %45 : vector<16x32xf32>
    %47 = vector.extract_strided_slice %42 {offsets = [32, 0], sizes = [16, 32], strides = [1, 1]} : vector<64x32xf32> to vector<16x32xf32>
    %48 = arith.addf %46, %47 : vector<16x32xf32>
    %49 = vector.extract_strided_slice %42 {offsets = [48, 0], sizes = [16, 32], strides = [1, 1]} : vector<64x32xf32> to vector<16x32xf32>
    %50 = arith.addf %48, %49 : vector<16x32xf32>
    %51 = vector.broadcast %43 : vector<1x32xf32> to vector<16x32xf32>
    %52 = arith.addf %50, %51 : vector<16x32xf32>
    %c144 = arith.constant 144 : index
    %c0_19 = arith.constant 0 : index
    %53 = vector.load %arg1[%c144, %c0_19] : memref<192x96xbf16, #tpu.memory_space<vmem>>, vector<32x16xbf16>
    %c24 = arith.constant 24 : index
    %c0_20 = arith.constant 0 : index
    %54 = vector.load %arg2[%c24, %c0_20] : memref<168x96xf32, #tpu.memory_space<vmem>>, vector<1x16xf32>
    %55 = arith.truncf %52 : vector<16x32xf32> to vector<16x32xbf16>
    %cst_21 = arith.constant dense<0.000000e+00> : vector<16x16xf32>
    %56 = tpu.matmul %55, %53, %cst_21 {dimension_numbers = #tpu.dot_dimension_numbers<[1], [0], [0], [1], [0, 0, 1, 1], [], []>} : vector<16x32xbf16>, vector<32x16xbf16>, vector<16x16xf32> -> vector<16x16xf32>
    %57 = vector.broadcast %54 : vector<1x16xf32> to vector<16x16xf32>
    %58 = arith.addf %56, %57 : vector<16x16xf32>
    %cst_22 = arith.constant 0.000000e+00 : f32
    %59 = vector.broadcast %cst_22 : f32 to vector<16x16xf32>
    %60 = arith.maximumf %58, %59 : vector<16x16xf32>
    %c176 = arith.constant 176 : index
    %c0_23 = arith.constant 0 : index
    %61 = vector.load %arg1[%c176, %c0_23] : memref<192x96xbf16, #tpu.memory_space<vmem>>, vector<1x16xbf16>
    %c32 = arith.constant 32 : index
    %c0_24 = arith.constant 0 : index
    %62 = vector.load %arg2[%c32, %c0_24] : memref<168x96xf32, #tpu.memory_space<vmem>>, vector<1x1xf32>
    %63 = arith.truncf %60 : vector<16x16xf32> to vector<16x16xbf16>
    %cst_25 = arith.constant dense<0.000000e+00> : vector<1x16xf32>
    %64 = tpu.matmul %61, %63, %cst_25 {dimension_numbers = #tpu.dot_dimension_numbers<[1], [1], [0], [0], [0, 0, 1, 0], [], []>} : vector<1x16xbf16>, vector<16x16xbf16>, vector<1x16xf32> -> vector<1x16xf32>
    %65 = vector.broadcast %62 : vector<1x1xf32> to vector<1x16xf32>
    %66 = arith.addf %64, %65 : vector<1x16xf32>
    %67 = math.tanh %66 : vector<1x16xf32>
    %c0_26 = arith.constant 0 : index
    %c0_27 = arith.constant 0 : index
    %68 = vector.load %arg3[%c0_26, %c0_27] : memref<1x16xf32, #tpu.memory_space<vmem>>, vector<1x16xf32>
    tpu.vector_store %arg3[%c0_26, %c0_27], %67 {strides = array<i32>} : memref<1x16xf32, #tpu.memory_space<vmem>>, vector<1x16xf32>,
    return
  }
}

</mosaic_0001>

<llo_original>
// kernel: tpu_custom_call.1
$region0: #{tpu_custom_call.1}
  #allocation0 [shape = 'u32[]', space=smem, size = 0x4, offset = 0x4, fixed_abs, tag = 'smem constant byte address 0x4 - core index']
  #allocation1 [shape = 'u32[72,128]{1,0:T(1,128)}', space=vmem, size = 0x9000, scoped, tag = 'internal scratch']
  %s0 = inlined_call_operand.hbm [shape: f32[16,12], index: 0, kind: input, shape index: {}]
  %s1 = inlined_call_operand.hbm [shape: bf16[192,96], index: 1, kind: input, shape index: {}]
  %s2 = inlined_call_operand.hbm [shape: f32[168,96], index: 2, kind: input, shape index: {}]
  %s3 = inlined_call_operand.hbm [shape: f32[1,16], index: 3, kind: output, shape index: {}]
  %s4 = sld [smem:[#allocation0]]
  $region34: #{tpu_custom_call.1} parent=0
    _
  %s6 = ssub.s32 1, %s4
  %s7 = scalar_select 0, %s6, %s4
  $region1: #{tpu_custom_call.1} parent=0
    #allocation2 [shape = 'u8[8192]{0}', space=vmem, size = 0x2000, scoped, tag = 'input window, operand 0, single buffered']
    #allocation3 [shape = 's32[1]{0}', space=sflag, size = 0x4, scoped, tag = 'scoped memory for tpu_custom_call.1']
    #allocation4 [shape = 's32[1]{0}', space=sflag, size = 0x4, scoped, tag = 'scoped memory for tpu_custom_call.1']
    #allocation5 [shape = 'u8[49152]{0}', space=vmem, size = 0xc000, scoped, tag = 'input window, operand 1, single buffered']
    #allocation6 [shape = 's32[1]{0}', space=sflag, size = 0x4, scoped, tag = 'scoped memory for tpu_custom_call.1']
    #allocation7 [shape = 'u8[86016]{0}', space=vmem, size = 0x15000, scoped, tag = 'input window, operand 2, single buffered']
    #allocation8 [shape = 'u8[512]{0}', space=vmem, size = 0x400, scoped, tag = 'output window, operand 0, single buffered']
    %8 = vsyncpa [#allocation3], 0
    %9 = vsyncpa [#allocation6], 0
    %10 = vsyncpa [#allocation4], 0
    // Predicated region
    $region2: #{tpu_custom_call.1} parent=1 // pred_check
      _
    $region3: #{tpu_custom_call.1} parent=1 // pred_check_branch
      %12 = sbr.rel (0) target = $region5
    $region4: #{tpu_custom_call.1} parent=1 // pred_region
      %14 = vsyncadd [#allocation3], 0
      %s15 = sshll.u32 %s0, 4
      %s16 = int_to_ptr.hbm [resolvable:$true] %s15
      %s17 = sshll.u32 [#allocation2], 4
      %s18 = int_to_ptr.vmem [resolvable:$true] %s17
      %23 = dma.hbm_to_vmem [thread:$0]  %s16, 256, %s18, [#allocation3], 128, 128, 8
    $region5: #{tpu_custom_call.1} parent=1 // pred_fallthru
      _
    // Predicated region
    $region6: #{tpu_custom_call.1} parent=1 // pred_check
      _
    $region7: #{tpu_custom_call.1} parent=1 // pred_check_branch
      %25 = sbr.rel (0) target = $region9
    $region8: #{tpu_custom_call.1} parent=1 // pred_region
      %27 = vsyncadd [#allocation6], 0
      %s28 = sshll.u32 %s1, 4
      %s29 = int_to_ptr.hbm [resolvable:$true] %s28
      %s30 = sshll.u32 [#allocation5], 4
      %s31 = int_to_ptr.vmem [resolvable:$true] %s30
      %36 = dma.hbm_to_vmem [thread:$0]  %s29, 1536, %s31, [#allocation6], 64, 64, 4
    $region9: #{tpu_custom_call.1} parent=1 // pred_fallthru
      _
    // Predicated region
    $region10: #{tpu_custom_call.1} parent=1 // pred_check
      _
    $region11: #{tpu_custom_call.1} parent=1 // pred_check_branch
      %38 = sbr.rel (0) target = $region13
    $region12: #{tpu_custom_call.1} parent=1 // pred_region
      %40 = vsyncadd [#allocation6], 0
      %s41 = sshll.u32 %s2, 4
      %s42 = int_to_ptr.hbm [resolvable:$true] %s41
      %s43 = sshll.u32 [#allocation7], 4
      %s44 = int_to_ptr.vmem [resolvable:$true] %s43
      %49 = dma.hbm_to_vmem [thread:$0]  %s42, 2688, %s44, [#allocation6], 128, 128, 8
    $region13: #{tpu_custom_call.1} parent=1 // pred_fallthru
      _
    // Predicated region
    $region14: #{tpu_custom_call.1} parent=1 // pred_check
      _
    $region15: #{tpu_custom_call.1} parent=1 // pred_check_branch
      %51 = sbr.rel (0) target = $region17
    $region16: #{tpu_custom_call.1} parent=1 // pred_region
      %53 = dma.done [#allocation3], 256
    $region17: #{tpu_custom_call.1} parent=1 // pred_fallthru
      _
    // Predicated region
    $region18: #{tpu_custom_call.1} parent=1 // pred_check
      _
    $region19: #{tpu_custom_call.1} parent=1 // pred_check_branch
      %55 = sbr.rel (0) target = $region21
    $region20: #{tpu_custom_call.1} parent=1 // pred_region
      %57 = dma.done [#allocation6], 1536
    $region21: #{tpu_custom_call.1} parent=1 // pred_fallthru
      _
    // Predicated region
    $region22: #{tpu_custom_call.1} parent=1 // pred_check
      _
    $region23: #{tpu_custom_call.1} parent=1 // pred_check_branch
      %59 = sbr.rel (0) target = $region25
    $region24: #{tpu_custom_call.1} parent=1 // pred_region
      %61 = dma.done [#allocation6], 2688
    $region25: #{tpu_custom_call.1} parent=1 // pred_fallthru
      _
    %v63 = vld [vmem:[#allocation2] sm:$0xff]
    %v64 = vld [vmem:[#allocation2 + $0x8] sm:$0xff]
    %v65 = vpack.c.bf16 %v64, %v63
    %v66 = vld [vmem:[#allocation5] sm:$0xf]
    %v67 = vld [vmem:[#allocation5 + $0x4] sm:$0x3]
    %v68 = vld [vmem:[#allocation7] sm:$0x1]
    %v69 = vperm.slane %v68, 0
    %v72 = vunpack.c.l.b16 %v66
    %v73 = vunpack.c.l.b16 %v67
    %v74 = vpack.c.b16 %v73, %v72
    %vm75 = vcmask 97280
    %v77 = vsel %vm75, %v65, 0
    %vm79 = vcmask 1045504
    %v81 = vsel %vm79, %v74, 0
    %83 = vmatpush.bf16.msra.mxu0 0
    %84 = vmatpush.bf16.msra.mxu0 0
    %85 = vmatpush.bf16.msra.mxu0 0
    %86 = vmatpush.bf16.msra.mxu0 0
    %87 = vmatpush.bf16.msra.mxu0 0
    %88 = vmatpush.bf16.msra.mxu0 0
    %89 = vmatpush.bf16.msra.mxu0 0
    %90 = vmatpush.bf16.msra.mxu0 %v81
    %91 = vmatmul.bf16.gmra.mxu0 %v77
    %v92 = vpop.f32.mrf.mxu0
    %v93 = vadd.f32 %v69, %v92
    %v94 = vpop.f32.mrf.mxu0
    %v95 = vadd.f32 %v69, %v94
    %96 = vdwg.mxu0
    %v97 = vmax.f32 %v93, 0.0
    %v98 = vmax.f32 %v95, 0.0
    %v99 = vld [vmem:[#allocation5 + $0x8] sm:$0xf]
    %v100 = vld [vmem:[#allocation5 + $0xc] sm:$0xf]
    %v101 = vld [vmem:[#allocation5 + $0x10] sm:$0xf]
    %v102 = vld [vmem:[#allocation5 + $0x14] sm:$0xf]
    %v103 = vld [vmem:[#allocation5 + $0x18] sm:$0xf]
    %v104 = vld [vmem:[#allocation5 + $0x1c] sm:$0xf]
    %v105 = vld [vmem:[#allocation5 + $0x20] sm:$0xf]
    %v106 = vld [vmem:[#allocation5 + $0x24] sm:$0xf]
    %v107 = vld [vmem:[#allocation5 + $0x28] sm:$0xf]
    %v108 = vld [vmem:[#allocation5 + $0x2c] sm:$0xf]
    %v109 = vld [vmem:[#allocation5 + $0x30] sm:$0xf]
    %v110 = vld [vmem:[#allocation5 + $0x34] sm:$0xf]
    %v111 = vld [vmem:[#allocation7 + $0x8] sm:$0x1]
    %v112 = vpack.c.bf16 %v98, %v97
    %v113 = vperm.slane %v111, 0
    %v126 = vunpack.c.l.b16 %v99
    %v127 = vunpack.c.l.b16 %v100
    %v128 = vunpack.c.l.b16 %v101
    %v129 = vunpack.c.l.b16 %v102
    %v130 = vunpack.c.l.b16 %v103
    %v131 = vunpack.c.l.b16 %v104
    %v132 = vunpack.c.l.b16 %v105
    %v133 = vunpack.c.l.b16 %v106
    %v134 = vunpack.c.l.b16 %v107
    %v135 = vunpack.c.l.b16 %v108
    %v136 = vunpack.c.l.b16 %v109
    %v137 = vunpack.c.l.b16 %v110
    %v138 = vpack.c.b16 %v127, %v126
    %v139 = vpack.c.b16 %v129, %v128
    %v140 = vpack.c.b16 %v131, %v130
    %v141 = vpack.c.b16 %v133, %v132
    %v142 = vpack.c.b16 %v135, %v134
    %v143 = vpack.c.b16 %v137, %v136
    %vm150 = vcmask 785408
    %v152 = vsel %vm150, %v112, 0
    %154 = vmatpush.bf16.msra.mxu0 0
    %155 = vmatpush.bf16.msra.mxu0 0
    %156 = vmatpush.bf16.msra.mxu0 %v143
    %157 = vmatpush.bf16.msra.mxu0 %v142
    %158 = vmatpush.bf16.msra.mxu0 %v141
    %159 = vmatpush.bf16.msra.mxu0 %v140
    %160 = vmatpush.bf16.msra.mxu0 %v139
    %161 = vmatpush.bf16.msra.mxu0 %v138
    %162 = vmatmul.bf16.gmra.mxu0 %v152
    %v163 = vpop.f32.mrf.mxu0
    %v164 = vadd.f32 %v113, %v163
    %v165 = vpop.f32.mrf.mxu0
    %v166 = vadd.f32 %v113, %v165
    %167 = vdwg.mxu0
    %v168 = vld [vmem:[#allocation7 + $0x68] sm:$0xff]
    %v169 = vld [vmem:[#allocation7 + $0x70] sm:$0xff]
    %v170 = vld [vmem:[#allocation7 + $0x78] sm:$0xff]
    %v171 = vld [vmem:[#allocation7 + $0x80] sm:$0xff]
    %v172 = vld [vmem:[#allocation7 + $0x88] sm:$0xff]
    %v173 = vld [vmem:[#allocation7 + $0x90] sm:$0xff]
    %v174 = vld [vmem:[#allocation7 + $0x98] sm:$0xff]
    %v175 = vld [vmem:[#allocation7 + $0xa0] sm:$0xff]
    %v176 = vld [vmem:[#allocation7 + $0x28] sm:$0xff]
    %v177 = vld [vmem:[#allocation7 + $0x30] sm:$0xff]
    %v178 = vld [vmem:[#allocation7 + $0x38] sm:$0xff]
    %v179 = vld [vmem:[#allocation7 + $0x40] sm:$0xff]
    %v180 = vld [vmem:[#allocation7 + $0x48] sm:$0xff]
    %v181 = vld [vmem:[#allocation7 + $0x50] sm:$0xff]
    %v182 = vld [vmem:[#allocation7 + $0x58] sm:$0xff]
    %v183 = vld [vmem:[#allocation7 + $0x60] sm:$0xff]
    %v184 = vmul.f32 %v164, %v168
    %v185 = vmul.f32 %v166, %v169
    %v186 = vmul.f32 %v164, %v170
    %v187 = vmul.f32 %v166, %v171
    %v188 = vmul.f32 %v164, %v172
    %v189 = vmul.f32 %v166, %v173
    %v190 = vmul.f32 %v164, %v174
    %v191 = vmul.f32 %v166, %v175
    %v192 = vpack.c.bf16 %v185, %v184
    %v193 = vpack.c.bf16 %v187, %v186
    %v194 = vpack.c.bf16 %v189, %v188
    %v195 = vpack.c.bf16 %v191, %v190
    %v196 = vpack.c.bf16 %v166, %v164
    %198 = vrot.lane.b32.xlu0 %v196, 96
    %v199 = vpop.permute.xlu0 %198
    %vm200 = vcmask 261120
    %v202 = vsel %vm200, %v192, 0
    %v205 = vsel %vm200, %v193, 0
    %v208 = vsel %vm200, %v194, 0
    %v211 = vsel %vm200, %v195, 0
    %v214 = vsel %vm200, %v199, 0
    %216 = vmatpush.bf16.xpose.msra.mxu0 0
    %217 = vmatpush.bf16.xpose.msra.mxu0 0
    %218 = vmatpush.bf16.xpose.msra.mxu0 0
    %219 = vmatpush.bf16.xpose.msra.mxu0 0
    %220 = vmatpush.bf16.xpose.msra.mxu0 0
    %221 = vmatpush.bf16.xpose.msra.mxu0 0
    %222 = vmatpush.bf16.xpose.msra.mxu0 0
    %223 = vmatpush.bf16.xpose.msra.mxu0 %v214
    %224 = vmatmul.bf16.gmra.mxu0 %v202
    %v225 = vpop.f32.mrf.mxu0
    %v226 = vadd.f32 %v176, %v225
    %v227 = vpop.f32.mrf.mxu0
    %v228 = vadd.f32 %v177, %v227
    %229 = vmatmul.bf16.gmra.mxu0 %v205
    %v230 = vpop.f32.mrf.mxu0
    %v231 = vadd.f32 %v178, %v230
    %v232 = vpop.f32.mrf.mxu0
    %v233 = vadd.f32 %v179, %v232
    %234 = vmatmul.bf16.gmra.mxu0 %v208
    %v235 = vpop.f32.mrf.mxu0
    %v236 = vadd.f32 %v180, %v235
    %v237 = vpop.f32.mrf.mxu0
    %v238 = vadd.f32 %v181, %v237
    %239 = vmatmul.bf16.gmra.mxu0 %v211
    %v240 = vpop.f32.mrf.mxu0
    %v241 = vadd.f32 %v182, %v240
    %v242 = vpop.f32.mrf.mxu0
    %v243 = vadd.f32 %v183, %v242
    %244 = vdwg.mxu0
    %vm245 = vcmask 130048
    %v246 = vsel %vm245, %v226, -inf
    %247 = vmax.xlane.f32.xlu0 %v246
    %v248 = vpop.xlane.xlu0 %247
    %v249 = vsel %vm245, %v228, -inf
    %250 = vmax.xlane.f32.xlu0 %v249
    %v251 = vpop.xlane.xlu0 %250
    %v252 = vsel %vm245, %v231, -inf
    %253 = vmax.xlane.f32.xlu0 %v252
    %v254 = vpop.xlane.xlu0 %253
    %v255 = vsel %vm245, %v233, -inf
    %256 = vmax.xlane.f32.xlu0 %v255
    %v257 = vpop.xlane.xlu0 %256
    %v258 = vsel %vm245, %v236, -inf
    %259 = vmax.xlane.f32.xlu0 %v258
    %v260 = vpop.xlane.xlu0 %259
    %v261 = vsel %vm245, %v238, -inf
    %262 = vmax.xlane.f32.xlu0 %v261
    %v263 = vpop.xlane.xlu0 %262
    %v264 = vsel %vm245, %v241, -inf
    %265 = vmax.xlane.f32.xlu0 %v264
    %v266 = vpop.xlane.xlu0 %265
    %v267 = vsel %vm245, %v243, -inf
    %268 = vmax.xlane.f32.xlu0 %v267
    %v269 = vpop.xlane.xlu0 %268
    %v270 = vsub.f32 %v226, %v248
    %v271 = vsub.f32 %v228, %v251
    %v272 = vsub.f32 %v231, %v254
    %v273 = vsub.f32 %v233, %v257
    %v274 = vsub.f32 %v236, %v260
    %v275 = vsub.f32 %v238, %v263
    %v276 = vsub.f32 %v241, %v266
    %v277 = vsub.f32 %v243, %v269
    %v278 = vmul.f32 %v270, 1.442695
    %v279 = vpow.pop %v278
    %v280 = vmul.f32 %v271, 1.442695
    %v281 = vpow.pop %v280
    %v282 = vmul.f32 %v272, 1.442695
    %v283 = vpow.pop %v282
    %v284 = vmul.f32 %v273, 1.442695
    %v285 = vpow.pop %v284
    %v286 = vmul.f32 %v274, 1.442695
    %v287 = vpow.pop %v286
    %v288 = vmul.f32 %v275, 1.442695
    %v289 = vpow.pop %v288
    %v290 = vmul.f32 %v276, 1.442695
    %v291 = vpow.pop %v290
    %v292 = vmul.f32 %v277, 1.442695
    %v293 = vpow.pop %v292
    %v294 = vsel %vm245, %v279, 0.0
    %295 = vadd.xlane.f32.xlu0 %v294
    %v296 = vpop.xlane.xlu0 %295
    %v297 = vsel %vm245, %v281, 0.0
    %298 = vadd.xlane.f32.xlu0 %v297
    %v299 = vpop.xlane.xlu0 %298
    %v300 = vsel %vm245, %v283, 0.0
    %301 = vadd.xlane.f32.xlu0 %v300
    %v302 = vpop.xlane.xlu0 %301
    %v303 = vsel %vm245, %v285, 0.0
    %304 = vadd.xlane.f32.xlu0 %v303
    %v305 = vpop.xlane.xlu0 %304
    %v306 = vsel %vm245, %v287, 0.0
    %307 = vadd.xlane.f32.xlu0 %v306
    %v308 = vpop.xlane.xlu0 %307
    %v309 = vsel %vm245, %v289, 0.0
    %310 = vadd.xlane.f32.xlu0 %v309
    %v311 = vpop.xlane.xlu0 %310
    %v312 = vsel %vm245, %v291, 0.0
    %313 = vadd.xlane.f32.xlu0 %v312
    %v314 = vpop.xlane.xlu0 %313
    %v315 = vsel %vm245, %v293, 0.0
    %316 = vadd.xlane.f32.xlu0 %v315
    %v317 = vpop.xlane.xlu0 %316
    %v318 = vrcp.pop %v296
    %v319 = vrcp.pop %v299
    %v320 = vrcp.pop %v302
    %v321 = vrcp.pop %v305
    %v322 = vrcp.pop %v308
    %v323 = vrcp.pop %v311
    %v324 = vrcp.pop %v314
    %v325 = vrcp.pop %v317
    %v326 = vmul.f32 %v279, %v318
    %v327 = vmul.f32 %v281, %v319
    %v328 = vmul.f32 %v283, %v320
    %v329 = vmul.f32 %v285, %v321
    %v330 = vmul.f32 %v287, %v322
    %v331 = vmul.f32 %v289, %v323
    %v332 = vmul.f32 %v291, %v324
    %v333 = vmul.f32 %v293, %v325
    %v334 = vpack.c.bf16 %v327, %v326
    %v335 = vpack.c.bf16 %v329, %v328
    %v336 = vpack.c.bf16 %v331, %v330
    %v337 = vpack.c.bf16 %v333, %v332
    %338 = vrot.lane.b32.xlu0 %v196, 64
    %v339 = vpop.permute.xlu0 %338
    %v342 = vsel %vm245, %v334, 0
    %v345 = vsel %vm245, %v335, 0
    %v348 = vsel %vm245, %v336, 0
    %v351 = vsel %vm245, %v337, 0
    %353 = vmatpush.bf16.msra.mxu0 0
    %354 = vmatpush.bf16.msra.mxu0 0
    %355 = vmatpush.bf16.msra.mxu0 0
    %356 = vmatpush.bf16.msra.mxu0 0
    %357 = vmatpush.bf16.msra.mxu0 0
    %358 = vmatpush.bf16.msra.mxu0 0
    %359 = vmatpush.bf16.msra.mxu0 0
    %360 = vmatpush.bf16.msra.mxu0 %v339
    %361 = vmatmul.bf16.gmra.mxu0 %v342
    %v362 = vpop.f32.mrf.mxu0
    %v363 = vadd.f32 0.0, %v362
    %v364 = vpop.f32.mrf.mxu0
    %v365 = vadd.f32 0.0, %v364
    %366 = vmatmul.bf16.gmra.mxu0 %v345
    %v367 = vpop.f32.mrf.mxu0
    %v368 = vadd.f32 0.0, %v367
    %v369 = vpop.f32.mrf.mxu0
    %v370 = vadd.f32 0.0, %v369
    %371 = vmatmul.bf16.gmra.mxu0 %v348
    %v372 = vpop.f32.mrf.mxu0
    %v373 = vadd.f32 0.0, %v372
    %v374 = vpop.f32.mrf.mxu0
    %v375 = vadd.f32 0.0, %v374
    %376 = vmatmul.bf16.gmra.mxu0 %v351
    %v377 = vpop.f32.mrf.mxu0
    %v378 = vadd.f32 0.0, %v377
    %v379 = vpop.f32.mrf.mxu0
    %v380 = vadd.f32 0.0, %v379
    %381 = vdwg.mxu0
    %v382 = vmul.f32 %v363, %v168
    %v383 = vmul.f32 %v365, %v169
    %v384 = vmul.f32 %v368, %v170
    %v385 = vmul.f32 %v370, %v171
    %v386 = vmul.f32 %v373, %v172
    %v387 = vmul.f32 %v375, %v173
    %v388 = vmul.f32 %v378, %v174
    %v389 = vmul.f32 %v380, %v175
    %v390 = vld [vmem:[#allocation5 + $0x38] sm:$0xf]
    %v391 = vld [vmem:[#allocation5 + $0x3c] sm:$0xf]
    %v392 = vld [vmem:[#allocation5 + $0x40] sm:$0xf]
    %v393 = vld [vmem:[#allocation5 + $0x44] sm:$0xf]
    %v394 = vpack.c.bf16 %v383, %v382
    %v395 = vpack.c.bf16 %v385, %v384
    %v396 = vpack.c.bf16 %v387, %v386
    %v397 = vpack.c.bf16 %v389, %v388
    %v402 = vunpack.c.l.b16 %v390
    %v403 = vunpack.c.l.b16 %v391
    %v404 = vunpack.c.l.b16 %v392
    %v405 = vunpack.c.l.b16 %v393
    %v406 = vpack.c.b16 %v403, %v402
    %v407 = vpack.c.b16 %v405, %v404
    %v411 = vsel %vm200, %v394, 0
    %v414 = vsel %vm200, %v395, 0
    %v417 = vsel %vm200, %v396, 0
    %v420 = vsel %vm200, %v397, 0
    %422 = vmatpush.bf16.msra.mxu0 0
    %423 = vmatpush.bf16.msra.mxu0 0
    %424 = vmatpush.bf16.msra.mxu0 0
    %425 = vmatpush.bf16.msra.mxu0 0
    %426 = vmatpush.bf16.msra.mxu0 0
    %427 = vmatpush.bf16.msra.mxu0 0
    %428 = vmatpush.bf16.msra.mxu0 %v407
    %429 = vmatpush.bf16.msra.mxu0 %v406
    %430 = vmatmul.bf16.gmra.mxu0 %v411
    %v431 = vpop.f32.mrf.mxu0
    %v432 = vadd.f32 0.0, %v431
    %v433 = vpop.f32.mrf.mxu0
    %v434 = vadd.f32 0.0, %v433
    %435 = vmatmul.bf16.gmra.mxu0 %v414
    %v436 = vpop.f32.mrf.mxu0
    %v437 = vadd.f32 0.0, %v436
    %v438 = vpop.f32.mrf.mxu0
    %v439 = vadd.f32 0.0, %v438
    %440 = vmatmul.bf16.gmra.mxu0 %v417
    %v441 = vpop.f32.mrf.mxu0
    %v442 = vadd.f32 0.0, %v441
    %v443 = vpop.f32.mrf.mxu0
    %v444 = vadd.f32 0.0, %v443
    %445 = vmatmul.bf16.gmra.mxu0 %v420
    %v446 = vpop.f32.mrf.mxu0
    %v447 = vadd.f32 0.0, %v446
    %v448 = vpop.f32.mrf.mxu0
    %v449 = vadd.f32 0.0, %v448
    %450 = vdwg.mxu0
    %v451 = vld [vmem:[#allocation7 + $0x10] sm:$0x1]
    %v452 = vadd.f32 %v432, %v437
    %v453 = vadd.f32 %v434, %v439
    %v454 = vadd.f32 %v452, %v442
    %v455 = vadd.f32 %v453, %v444
    %v456 = vadd.f32 %v454, %v447
    %v457 = vadd.f32 %v455, %v449
    %v458 = vperm.slane %v451, 0
    %v459 = vadd.f32 %v456, %v458
    %v460 = vadd.f32 %v457, %v458
    %v461 = vld [vmem:[#allocation5 + $0x48] sm:$0xf]
    %v462 = vld [vmem:[#allocation5 + $0x4c] sm:$0xf]
    %v463 = vld [vmem:[#allocation5 + $0x50] sm:$0xf]
    %v464 = vld [vmem:[#allocation5 + $0x54] sm:$0xf]
    %v465 = vld [vmem:[#allocation7 + $0x18] sm:$0x1]
    %v466 = vpack.c.bf16 %v460, %v459
    %v467 = vperm.slane %v465, 0
    %v472 = vunpack.c.l.b16 %v461
    %v473 = vunpack.c.l.b16 %v462
    %v474 = vunpack.c.l.b16 %v463
    %v475 = vunpack.c.l.b16 %v464
    %v476 = vpack.c.b16 %v473, %v472
    %v477 = vpack.c.b16 %v475, %v474
    %v481 = vsel %vm200, %v466, 0
    %483 = vmatpush.bf16.msra.mxu0 0
    %484 = vmatpush.bf16.msra.mxu0 0
    %485 = vmatpush.bf16.msra.mxu0 0
    %486 = vmatpush.bf16.msra.mxu0 0
    %487 = vmatpush.bf16.msra.mxu0 0
    %488 = vmatpush.bf16.msra.mxu0 0
    %489 = vmatpush.bf16.msra.mxu0 %v477
    %490 = vmatpush.bf16.msra.mxu0 %v476
    %491 = vmatmul.bf16.gmra.mxu0 %v481
    %v492 = vpop.f32.mrf.mxu0
    %v493 = vadd.f32 %v467, %v492
    %v494 = vpop.f32.mrf.mxu0
    %v495 = vadd.f32 %v467, %v494
    %496 = vdwg.mxu0
    %v497 = vmax.f32 %v493, 0.0
    %v498 = vmax.f32 %v495, 0.0
    %v499 = vld [vmem:[#allocation5 + $0x58] sm:$0x1]
    %v500 = vld [vmem:[#allocation7 + $0x20] sm:$0x1]
    %v501 = vpack.c.bf16 %v498, %v497
    %503 = vset.pattern.permute.xlu0 0
    %504 = vperm.xlu0 %503, %v500
    %v505 = vpop.permute.xlu0 %504
    %v508 = vsel %vm245, %v499, 0
    %v511 = vsel %vm245, %v501, 0
    %513 = vmatpush.bf16.xpose.msra.mxu0 0
    %514 = vmatpush.bf16.xpose.msra.mxu0 0
    %515 = vmatpush.bf16.xpose.msra.mxu0 0
    %516 = vmatpush.bf16.xpose.msra.mxu0 0
    %517 = vmatpush.bf16.xpose.msra.mxu0 0
    %518 = vmatpush.bf16.xpose.msra.mxu0 0
    %519 = vmatpush.bf16.xpose.msra.mxu0 0
    %520 = vmatpush.bf16.xpose.msra.mxu0 %v511
    %521 = vmatmul.bf16.gmra.mxu0 %v508
    %v522 = vpop.f32.mrf.mxu0
    %v523 = vadd.f32 %v505, %v522
    %v524 = vpop.f32.mrf.mxu0
    %525 = vdwg.mxu0
    %v526 = vtanh.pop %v523
    %vm527 = vcmask 122880
    %528 = vst.msk [vmem:[#allocation8] sm:$0x1] %vm527, %v526
    // Predicated region
    $region26: #{tpu_custom_call.1} parent=1 // pred_check
      _
    $region27: #{tpu_custom_call.1} parent=1 // pred_check_branch
      %530 = sbr.rel (0) target = $region29
    $region28: #{tpu_custom_call.1} parent=1 // pred_region
      %532 = vsyncadd [#allocation4], 0
      %s534 = sshll.u32 [#allocation8], 4
      %s535 = int_to_ptr.vmem [resolvable:$true] %s534
      %s536 = sshll.u32 %s3, 4
      %s537 = int_to_ptr.hbm [resolvable:$true] %s536
      %539 = dma.vmem_to_hbm [thread:$0]  %s535, 16, %s537, [#allocation4]
    $region29: #{tpu_custom_call.1} parent=1 // pred_fallthru
      _
    // Predicated region
    $region30: #{tpu_custom_call.1} parent=1 // pred_check
      _
    $region31: #{tpu_custom_call.1} parent=1 // pred_check_branch
      %541 = sbr.rel (0) target = $region33
    $region32: #{tpu_custom_call.1} parent=1 // pred_region
      %543 = dma.done [#allocation4], 16
    $region33: #{tpu_custom_call.1} parent=1 // pred_fallthru
      _
    %544 = vsyncpa [#allocation3], 1
    %545 = vsyncpa [#allocation6], 1
    %546 = vsyncpa [#allocation4], 1

</llo_original>
